<compile_context>
chip_gen: v7x
topology: tpu7x:2x2x1
jax: 0.10.0
libtpu: 0.0.40
codegen_flags: <defaults>
</compile_context>

<pallas_src>
import functools

import jax
import jax.numpy as jnp
from jax.experimental import pallas as pl
from jax.experimental.pallas import tpu as pltpu


def _round_up(x, m):
    return (x + m - 1) // m * m


def _critic_kernel(x_ref, w1_ref, b1_ref, w2_ref, b2_ref, w3_ref, b3_ref, o_ref):
    # Layer 1: Linear + ReLU. bf16 MXU inputs, f32 accumulate, f32 epilogue.
    x = x_ref[...]
    h1 = jnp.dot(x.astype(jnp.bfloat16), w1_ref[...].astype(jnp.bfloat16),
                 preferred_element_type=jnp.float32)
    h1 = jnp.maximum(h1 + b1_ref[...], 0.0)

    # Layer 2: Linear + ReLU (same bf16-in / f32-acc scheme).
    h2 = jnp.dot(h1.astype(jnp.bfloat16), w2_ref[...].astype(jnp.bfloat16),
                 preferred_element_type=jnp.float32)
    h2 = jnp.maximum(h2 + b2_ref[...], 0.0)

    # Value head (out_features = 1): VPU mul + XLU lane reduce instead of a
    # nearly-empty N=1 MXU pass.  w3 is a (1, 256) row, b3 a scalar in SMEM.
    v = jnp.sum(h2 * w3_ref[...], axis=-1, keepdims=True) + b3_ref[0]
    # TODO(synk): for very large B, emitting a lane-major (1, TB) row instead
    # of a (TB, 1) column would turn this masked vst.msk store into an
    # unmasked lane-dense store; kept column-major here to match (B, 1) output.
    o_ref[...] = v.astype(o_ref.dtype)


@functools.partial(jax.jit, static_argnames=("block_b",))
def critic_forward(state, params, *, block_b=128):
    """Fused critic MLP forward: state (B, D_in) f32 -> value (B, 1) f32."""
    w1, b1, w2, b2, w3, b3 = params
    B, d_in = state.shape
    fc1 = w1.shape[1]
    fc2 = w2.shape[1]

    # Tile the batch; pad to a multiple of the tile (tile is a multiple of 8
    # sublanes, capped at block_b rows so VMEM stays bounded at huge B).
    tb = min(block_b, _round_up(B, 8))
    bp = _round_up(B, tb)
    if bp != B:
        state = jnp.pad(state, ((0, bp - B), (0, 0)))
    grid = (bp // tb,)

    out = pl.pallas_call(
        _critic_kernel,
        out_shape=jax.ShapeDtypeStruct((bp, 1), jnp.float32),
        grid=grid,
        in_specs=[
            # state: one (tb, d_in) tile per grid step (double-buffered DMA).
            pl.BlockSpec((tb, d_in), lambda i: (i, 0), memory_space=pltpu.VMEM),
            # weights / biases: constant block index -> resident in VMEM,
            # not re-fetched across grid iterations.
            pl.BlockSpec((d_in, fc1), lambda i: (0, 0), memory_space=pltpu.VMEM),
            pl.BlockSpec((1, fc1), lambda i: (0, 0), memory_space=pltpu.VMEM),
            pl.BlockSpec((fc1, fc2), lambda i: (0, 0), memory_space=pltpu.VMEM),
            pl.BlockSpec((1, fc2), lambda i: (0, 0), memory_space=pltpu.VMEM),
            pl.BlockSpec((1, fc2), lambda i: (0, 0), memory_space=pltpu.VMEM),
            # b3: single scalar in SMEM.
            pl.BlockSpec(memory_space=pltpu.SMEM),
        ],
        out_specs=pl.BlockSpec((tb, 1), lambda i: (i, 0), memory_space=pltpu.VMEM),
        compiler_params=pltpu.CompilerParams(
            dimension_semantics=("parallel",)),
    )(state, w1, b1, w2, b2, w3, b3)
    return out[:B]


def init_params(key, input_dims, fc1_dims=256, fc2_dims=256):
    """Deterministic init mimicking PyTorch nn.Linear default U(-1/sqrt(fan_in), ..)."""
    ks = jax.random.split(key, 6)

    def uniform(k, shape, fan_in):
        bound = 1.0 / jnp.sqrt(float(fan_in))
        return jax.random.uniform(k, shape, jnp.float32, -bound, bound)

    # w1/w2 stored as (in, out) so the kernel does x @ W + b (== PyTorch x @ W.T).
    w1 = uniform(ks[0], (input_dims, fc1_dims), input_dims)
    b1 = uniform(ks[1], (1, fc1_dims), input_dims)
    w2 = uniform(ks[2], (fc1_dims, fc2_dims), fc1_dims)
    b2 = uniform(ks[3], (1, fc2_dims), fc1_dims)
    # Head weight kept as a (1, fc2) row (same shape as PyTorch Linear(fc2,1).weight)
    # so the kernel can reduce on the VPU/XLU instead of an N=1 MXU matmul.
    w3 = uniform(ks[4], (1, fc2_dims), fc2_dims)
    b3 = uniform(ks[5], (1,), fc2_dims)
    return (w1, b1, w2, b2, w3, b3)


def critic_reference(state, params):
    w1, b1, w2, b2, w3, b3 = params
    h1 = jnp.maximum(state @ w1 + b1, 0.0)
    h2 = jnp.maximum(h1 @ w2 + b2, 0.0)
    return h2 @ w3.T + b3


if __name__ == "__main__":
    key = jax.random.PRNGKey(0)
    k_param, k_state = jax.random.split(key)

    batch = 8          # small batch of states
    input_dims = 8     # e.g. LunarLander-style observation dim
    fc1_dims = 256
    fc2_dims = 256

    params = init_params(k_param, input_dims, fc1_dims, fc2_dims)
    state = jax.random.normal(k_state, (batch, input_dims), jnp.float32)

    val = critic_forward(state, params)
    val = jax.block_until_ready(val)

    ref = critic_reference(state, params)
    assert val.shape == (batch, 1), val.shape
    # Tolerance loosened vs pure-f32 because layers 1-2 use bf16 MXU inputs
    # (f32 accumulation); reference is full f32.
    max_err = jnp.max(jnp.abs(val - ref))
    assert jnp.allclose(val, ref, atol=2e-2, rtol=2e-2), (
        f"mismatch: max abs err {max_err}")

    print("KERNEL_OK")
</pallas_src>

<mosaic_0001>
module attributes {stable_mosaic.version = 11 : i64} {
  func.func @_critic_kernel(%arg0: i32, %arg1: memref<8x8xf32, #tpu.memory_space<vmem>>, %arg2: memref<8x256xf32, #tpu.memory_space<vmem>>, %arg3: memref<1x256xf32, #tpu.memory_space<vmem>>, %arg4: memref<256x256xf32, #tpu.memory_space<vmem>>, %arg5: memref<1x256xf32, #tpu.memory_space<vmem>>, %arg6: memref<1x256xf32, #tpu.memory_space<vmem>>, %arg7: memref<1xf32, #tpu.memory_space<smem>>, %arg8: memref<8x1xf32, #tpu.memory_space<vmem>>) attributes {dimension_semantics = [#tpu.dimension_semantics<parallel>], iteration_bounds = array<i64: 1>, scalar_prefetch = 0 : i64, scratch_operands = 0 : i64, tpu.core_type = #tpu.core_type<tc>, window_params = [{transform_indices = @transform_0, window_bounds = array<i64: 8, 8>}, {pipeline_mode = #tpu.pipeline_mode<synchronous>, transform_indices = @transform_1, window_bounds = array<i64: 8, 256>}, {pipeline_mode = #tpu.pipeline_mode<synchronous>, transform_indices = @transform_2, window_bounds = array<i64: 1, 256>}, {pipeline_mode = #tpu.pipeline_mode<synchronous>, transform_indices = @transform_3, window_bounds = array<i64: 256, 256>}, {pipeline_mode = #tpu.pipeline_mode<synchronous>, transform_indices = @transform_4, window_bounds = array<i64: 1, 256>}, {pipeline_mode = #tpu.pipeline_mode<synchronous>, transform_indices = @transform_5, window_bounds = array<i64: 1, 256>}, {transform_indices = @transform_6, window_bounds = array<i64: 1>}, {transform_indices = @transform_7, window_bounds = array<i64: 8, 1>}]} {
    %c0 = arith.constant 0 : index
    %c0_0 = arith.constant 0 : index
    %0 = vector.load %arg1[%c0, %c0_0] : memref<8x8xf32, #tpu.memory_space<vmem>>, vector<8x8xf32>
    %1 = arith.truncf %0 : vector<8x8xf32> to vector<8x8xbf16>
    %c0_1 = arith.constant 0 : index
    %c0_2 = arith.constant 0 : index
    %2 = vector.load %arg2[%c0_1, %c0_2] : memref<8x256xf32, #tpu.memory_space<vmem>>, vector<8x256xf32>
    %3 = arith.truncf %2 : vector<8x256xf32> to vector<8x256xbf16>
    %cst = arith.constant dense<0.000000e+00> : vector<8x256xf32>
    %4 = tpu.matmul %1, %3, %cst {dimension_numbers = #tpu.dot_dimension_numbers<[1], [0], [0], [1], [0, 0, 1, 1], [], []>} : vector<8x8xbf16>, vector<8x256xbf16>, vector<8x256xf32> -> vector<8x256xf32>
    %c0_3 = arith.constant 0 : index
    %c0_4 = arith.constant 0 : index
    %5 = vector.load %arg3[%c0_3, %c0_4] : memref<1x256xf32, #tpu.memory_space<vmem>>, vector<1x256xf32>
    %6 = vector.broadcast %5 : vector<1x256xf32> to vector<8x256xf32>
    %7 = arith.addf %4, %6 : vector<8x256xf32>
    %cst_5 = arith.constant 0.000000e+00 : f32
    %8 = vector.broadcast %cst_5 : f32 to vector<8x256xf32>
    %9 = arith.maximumf %7, %8 : vector<8x256xf32>
    %10 = arith.truncf %9 : vector<8x256xf32> to vector<8x256xbf16>
    %c0_6 = arith.constant 0 : index
    %c0_7 = arith.constant 0 : index
    %11 = vector.load %arg4[%c0_6, %c0_7] : memref<256x256xf32, #tpu.memory_space<vmem>>, vector<256x256xf32>
    %12 = arith.truncf %11 : vector<256x256xf32> to vector<256x256xbf16>
    %cst_8 = arith.constant dense<0.000000e+00> : vector<8x256xf32>
    %13 = tpu.matmul %10, %12, %cst_8 {dimension_numbers = #tpu.dot_dimension_numbers<[1], [0], [0], [1], [0, 0, 1, 1], [], []>} : vector<8x256xbf16>, vector<256x256xbf16>, vector<8x256xf32> -> vector<8x256xf32>
    %c0_9 = arith.constant 0 : index
    %c0_10 = arith.constant 0 : index
    %14 = vector.load %arg5[%c0_9, %c0_10] : memref<1x256xf32, #tpu.memory_space<vmem>>, vector<1x256xf32>
    %15 = vector.broadcast %14 : vector<1x256xf32> to vector<8x256xf32>
    %16 = arith.addf %13, %15 : vector<8x256xf32>
    %cst_11 = arith.constant 0.000000e+00 : f32
    %17 = vector.broadcast %cst_11 : f32 to vector<8x256xf32>
    %18 = arith.maximumf %16, %17 : vector<8x256xf32>
    %c0_12 = arith.constant 0 : index
    %c0_13 = arith.constant 0 : index
    %19 = vector.load %arg6[%c0_12, %c0_13] : memref<1x256xf32, #tpu.memory_space<vmem>>, vector<1x256xf32>
    %20 = vector.broadcast %19 : vector<1x256xf32> to vector<8x256xf32>
    %21 = arith.mulf %18, %20 : vector<8x256xf32>
    %cst_14 = arith.constant dense<0.000000e+00> : vector<8xf32>
    %22 = vector.multi_reduction <add>, %21, %cst_14 [1] : vector<8x256xf32> to vector<8xf32>
    %23 = vector.shape_cast %22 : vector<8xf32> to vector<8x1xf32>
    %c0_15 = arith.constant 0 : index
    %24 = memref.load %arg7[%c0_15] : memref<1xf32, #tpu.memory_space<smem>>
    %25 = vector.broadcast %24 : f32 to vector<8x1xf32>
    %26 = arith.addf %23, %25 : vector<8x1xf32>
    %c0_16 = arith.constant 0 : index
    %c0_17 = arith.constant 0 : index
    %27 = vector.load %arg8[%c0_16, %c0_17] : memref<8x1xf32, #tpu.memory_space<vmem>>, vector<8x1xf32>
    tpu.vector_store %arg8[%c0_16, %c0_17], %26 {strides = array<i32>} : memref<8x1xf32, #tpu.memory_space<vmem>>, vector<8x1xf32>,
    return
  }
  func.func @transform_0(%arg0: i32) -> (i32, i32) {
    %c0_i32 = arith.constant 0 : i32
    %c0_i32_0 = arith.constant 0 : i32
    return %arg0, %c0_i32 : i32, i32
  }
  func.func @transform_1(%arg0: i32) -> (i32, i32) {
    %c0_i32 = arith.constant 0 : i32
    %c0_i32_0 = arith.constant 0 : i32
    %c0_i32_1 = arith.constant 0 : i32
    return %c0_i32, %c0_i32_0 : i32, i32
  }
  func.func @transform_2(%arg0: i32) -> (i32, i32) {
    %c0_i32 = arith.constant 0 : i32
    %c0_i32_0 = arith.constant 0 : i32
    %c0_i32_1 = arith.constant 0 : i32
    return %c0_i32, %c0_i32_0 : i32, i32
  }
  func.func @transform_3(%arg0: i32) -> (i32, i32) {
    %c0_i32 = arith.constant 0 : i32
    %c0_i32_0 = arith.constant 0 : i32
    %c0_i32_1 = arith.constant 0 : i32
    return %c0_i32, %c0_i32_0 : i32, i32
  }
  func.func @transform_4(%arg0: i32) -> (i32, i32) {
    %c0_i32 = arith.constant 0 : i32
    %c0_i32_0 = arith.constant 0 : i32
    %c0_i32_1 = arith.constant 0 : i32
    return %c0_i32, %c0_i32_0 : i32, i32
  }
  func.func @transform_5(%arg0: i32) -> (i32, i32) {
    %c0_i32 = arith.constant 0 : i32
    %c0_i32_0 = arith.constant 0 : i32
    %c0_i32_1 = arith.constant 0 : i32
    return %c0_i32, %c0_i32_0 : i32, i32
  }
  func.func @transform_6(%arg0: i32) -> i32 {
    %c0_i32 = arith.constant 0 : i32
    %c0_i32_0 = arith.constant 0 : i32
    return %c0_i32 : i32
  }
  func.func @transform_7(%arg0: i32) -> (i32, i32) {
    %c0_i32 = arith.constant 0 : i32
    %c0_i32_0 = arith.constant 0 : i32
    return %arg0, %c0_i32 : i32, i32
  }
}

</mosaic_0001>

<llo_original>
// kernel: critic_forward.1
$region0: #{critic_forward.1}
  #allocation0 [shape = 'u32[]', space=smem, size = 0x4, offset = 0x4, fixed_abs, tag = 'smem constant byte address 0x4 - core index']
  #allocation1 [shape = 'u32[144,128]{1,0:T(1,128)}', space=vmem, size = 0x12000, scoped, tag = 'internal scratch']
  #allocation2 [shape = 'f32[1]{0:T(128)S(6)}', space=smem, size = 0x200, scoped, tag = 'scoped memory for critic_forward.1']
  %s0 = inlined_call_operand.hbm [shape: f32[8,8], index: 0, kind: input, shape index: {}]
  %s1 = inlined_call_operand.hbm [shape: f32[8,256], index: 1, kind: input, shape index: {}]
  %s2 = inlined_call_operand.vmem [shape: f32[1,256], index: 2, kind: input, shape index: {}]
  %s3 = inlined_call_operand.hbm [shape: f32[256,256], index: 3, kind: input, shape index: {}]
  %s4 = inlined_call_operand.vmem [shape: f32[1,256], index: 4, kind: input, shape index: {}]
  %s5 = inlined_call_operand.vmem [shape: f32[1,256], index: 5, kind: input, shape index: {}]
  %s6 = inlined_call_operand.<no memory space> [shape: f32[1], index: 6, kind: input, shape index: {}]
  %s7 = inlined_call_operand.vmem [shape: f32[8,1], index: 7, kind: output, shape index: {}]
  %s8 = sld [smem:[#allocation0]]
  $region50: #{critic_forward.1} parent=0
    _
  %s10 = ssub.s32 1, %s8
  %s11 = scalar_select 0, %s10, %s8
  %12 = sst [smem:[#allocation2]] %s6
  $region1: #{critic_forward.1} parent=0
    #allocation3 [shape = 'u8[4096]{0}', space=vmem, size = 0x1000, scoped, tag = 'input window, operand 0, single buffered']
    #allocation4 [shape = 's32[1]{0}', space=sflag, size = 0x4, scoped, tag = 'scoped memory for critic_forward.1']
    #allocation5 [shape = 'u8[8192]{0}', space=vmem, size = 0x2000, scoped, tag = 'input window, operand 1, single buffered']
    #allocation6 [shape = 's32[1]{0}', space=sflag, size = 0x4, scoped, tag = 'scoped memory for critic_forward.1']
    #allocation7 [shape = 'u8[262144]{0}', space=vmem, size = 0x40000, scoped, tag = 'input window, operand 3, single buffered']
    %13 = vsyncpa [#allocation4], 0
    %14 = vsyncpa [#allocation6], 0
    // Predicated region
    $region2: #{critic_forward.1} parent=1 // pred_check
      _
    $region3: #{critic_forward.1} parent=1 // pred_check_branch
      %16 = sbr.rel (0) target = $region5
    $region4: #{critic_forward.1} parent=1 // pred_region
      %s18 = ssub.s32 128, 128
      %19 = vsyncadd [#allocation4], %s18
      %s21 = sshll.u32 [#allocation3], 4
      %s22 = int_to_ptr.vmem [resolvable:$true] %s21
      %24 = dma.hbm_to_vmem [thread:$0]  %s0, 128, %s22, [#allocation4]
    $region5: #{critic_forward.1} parent=1 // pred_fallthru
      _
    // Predicated region
    $region6: #{critic_forward.1} parent=1 // pred_check
      _
    $region7: #{critic_forward.1} parent=1 // pred_check_branch
      %26 = sbr.rel (0) target = $region9
    $region8: #{critic_forward.1} parent=1 // pred_region
      %s28 = ssub.s32 256, 256
      %29 = vsyncadd [#allocation6], %s28
      %s31 = sshll.u32 [#allocation5], 4
      %s32 = int_to_ptr.vmem [resolvable:$true] %s31
      %34 = dma.hbm_to_vmem [thread:$0]  %s1, 256, %s32, [#allocation6]
    $region9: #{critic_forward.1} parent=1 // pred_fallthru
      _
    // Predicated region
    $region10: #{critic_forward.1} parent=1 // pred_check
      _
    $region11: #{critic_forward.1} parent=1 // pred_check_branch
      %36 = sbr.rel (0) target = $region13
    $region12: #{critic_forward.1} parent=1 // pred_region
      _
    $region13: #{critic_forward.1} parent=1 // pred_fallthru
      _
    // Predicated region
    $region14: #{critic_forward.1} parent=1 // pred_check
      _
    $region15: #{critic_forward.1} parent=1 // pred_check_branch
      %38 = sbr.rel (0) target = $region17
    $region16: #{critic_forward.1} parent=1 // pred_region
      %s40 = ssub.s32 8192, 8192
      %41 = vsyncadd [#allocation6], %s40
      %s42 = sshll.u32 [#allocation7], 4
      %s43 = int_to_ptr.vmem [resolvable:$true] %s42
      %48 = dma.hbm_to_vmem [thread:$0]  %s3, 8192, %s43, [#allocation6], 256, 256, 16
    $region17: #{critic_forward.1} parent=1 // pred_fallthru
      _
    // Predicated region
    $region18: #{critic_forward.1} parent=1 // pred_check
      _
    $region19: #{critic_forward.1} parent=1 // pred_check_branch
      %50 = sbr.rel (0) target = $region21
    $region20: #{critic_forward.1} parent=1 // pred_region
      _
    $region21: #{critic_forward.1} parent=1 // pred_fallthru
      _
    // Predicated region
    $region22: #{critic_forward.1} parent=1 // pred_check
      _
    $region23: #{critic_forward.1} parent=1 // pred_check_branch
      %52 = sbr.rel (0) target = $region25
    $region24: #{critic_forward.1} parent=1 // pred_region
      _
    $region25: #{critic_forward.1} parent=1 // pred_fallthru
      _
    // Predicated region
    $region26: #{critic_forward.1} parent=1 // pred_check
      _
    $region27: #{critic_forward.1} parent=1 // pred_check_branch
      %54 = sbr.rel (0) target = $region29
    $region28: #{critic_forward.1} parent=1 // pred_region
      _
    $region29: #{critic_forward.1} parent=1 // pred_fallthru
      _
    // Predicated region
    $region30: #{critic_forward.1} parent=1 // pred_check
      _
    $region31: #{critic_forward.1} parent=1 // pred_check_branch
      %56 = sbr.rel (0) target = $region33
    $region32: #{critic_forward.1} parent=1 // pred_region
      %57 = dma.done [#allocation4], 128
    $region33: #{critic_forward.1} parent=1 // pred_fallthru
      _
    // Predicated region
    $region34: #{critic_forward.1} parent=1 // pred_check
      _
    $region35: #{critic_forward.1} parent=1 // pred_check_branch
      %59 = sbr.rel (0) target = $region37
    $region36: #{critic_forward.1} parent=1 // pred_region
      %60 = dma.done [#allocation6], 256
    $region37: #{critic_forward.1} parent=1 // pred_fallthru
      _
    // Predicated region
    $region38: #{critic_forward.1} parent=1 // pred_check
      _
    $region39: #{critic_forward.1} parent=1 // pred_check_branch
      %62 = sbr.rel (0) target = $region41
    $region40: #{critic_forward.1} parent=1 // pred_region
      %63 = dma.done [#allocation6], 8192
    $region41: #{critic_forward.1} parent=1 // pred_fallthru
      _
    %v65 = vld [vmem:[#allocation3] sm:$0xff]
    %v66 = vpack.c.bf16 %v65, %v65
    %v67 = vld [vmem:[#allocation5] sm:$0xff]
    %v68 = vld [vmem:[#allocation5 + $0x8] sm:$0xff]
    %v69 = vpack.c.bf16 %v67, %v67
    %v70 = vpack.c.bf16 %v68, %v68
    %v71 = vld [vmem:[%s2] sm:$0x3]
    %v73 = vlaneseq
    %v74 = vshrl.u32 %v73, 7
    %v75 = vsub.s32 0, %v74
    %v76 = vrot.slane %v71, %v75
    %v77 = vlaneseq
    %v78 = vshrl.u32 %v77, 7
    %v79 = vsub.s32 1, %v78
    %v80 = vrot.slane %v71, %v79
    %vm83 = vcmask 64512
    %v85 = vsel %vm83, %v66, 0
    %vm87 = vcmask 1043456
    %v89 = vsel %vm87, %v69, 0
    %v92 = vsel %vm87, %v70, 0
    %94 = vmatprep.subr.bf16.mxu0 %v92
    %95 = vmatpush1.bf16.msra.mxu0 %v89
    %96 = vmatprep.subr.bf16.mxu0 0
    %97 = vmatpush1.bf16.msra.mxu0 0
    %98 = vmatprep.subr.bf16.mxu0 0
    %99 = vmatpush1.bf16.msra.mxu0 0
    %100 = vmatprep.subr.bf16.mxu0 0
    %101 = vmatpush1.bf16.msra.mxu0 0
    %102 = vmatprep.subr.bf16.mxu0 0
    %103 = vmatpush1.bf16.msra.mxu0 0
    %104 = vmatprep.subr.bf16.mxu0 0
    %105 = vmatpush1.bf16.msra.mxu0 0
    %106 = vmatprep.subr.bf16.mxu0 0
    %107 = vmatpush1.bf16.msra.mxu0 0
    %108 = vmatprep.subr.bf16.mxu0 0
    %109 = vmatpush1.bf16.msra.mxu0 0
    %110 = vmatprep.subr.bf16.mxu0 0
    %111 = vmatpush1.bf16.msra.mxu0 0
    %112 = vmatprep.subr.bf16.mxu0 0
    %113 = vmatpush1.bf16.msra.mxu0 0
    %114 = vmatprep.subr.bf16.mxu0 0
    %115 = vmatpush1.bf16.msra.mxu0 0
    %116 = vmatprep.subr.bf16.mxu0 0
    %117 = vmatpush1.bf16.msra.mxu0 0
    %118 = vmatprep.subr.bf16.mxu0 0
    %119 = vmatpush1.bf16.msra.mxu0 0
    %120 = vmatprep.subr.bf16.mxu0 0
    %121 = vmatpush1.bf16.msra.mxu0 0
    %122 = vmatprep.subr.bf16.mxu0 0
    %123 = vmatpush1.bf16.msra.mxu0 0
    %124 = vmatprep.subr.bf16.mxu0 0
    %125 = vmatpush1.bf16.msra.mxu0 0
    %126 = vmatprep.mubr.bf16.mxu0 0
    %127 = vmatmul.mubr.bf16.gmra.mrb[0].mxu0 %v85
    %v128 = vpop.f32.mrb[0].mxu0
    %v129 = vadd.f32 %v76, %v128
    %v130 = vpop.f32.mrb[0].mxu0
    %v131 = vadd.f32 %v80, %v130
    %v132 = vpop.f32.mrb[0].mxu0
    %v133 = vpop.f32.mrb[0].mxu0
    %134 = vdwg.mxu0
    %v135 = vmax.f32 %v129, 0.0
    %v136 = vmax.f32 %v131, 0.0
    %v137 = vpack.c.bf16 %v135, %v135
    %v138 = vpack.c.bf16 %v136, %v136
    %v139 = vld [vmem:[#allocation7] sm:$0xff]
    %v140 = vld [vmem:[#allocation7 + $0x8] sm:$0xff]
    %v141 = vld [vmem:[#allocation7 + $0x10] sm:$0xff]
    %v142 = vld [vmem:[#allocation7 + $0x18] sm:$0xff]
    %v143 = vld [vmem:[#allocation7 + $0x20] sm:$0xff]
    %v144 = vld [vmem:[#allocation7 + $0x28] sm:$0xff]
    %v145 = vld [vmem:[#allocation7 + $0x30] sm:$0xff]
    %v146 = vld [vmem:[#allocation7 + $0x38] sm:$0xff]
    %v147 = vld [vmem:[#allocation7 + $0x40] sm:$0xff]
    %v148 = vld [vmem:[#allocation7 + $0x48] sm:$0xff]
    %v149 = vld [vmem:[#allocation7 + $0x50] sm:$0xff]
    %v150 = vld [vmem:[#allocation7 + $0x58] sm:$0xff]
    %v151 = vld [vmem:[#allocation7 + $0x60] sm:$0xff]
    %v152 = vld [vmem:[#allocation7 + $0x68] sm:$0xff]
    %v153 = vld [vmem:[#allocation7 + $0x70] sm:$0xff]
    %v154 = vld [vmem:[#allocation7 + $0x78] sm:$0xff]
    %v155 = vld [vmem:[#allocation7 + $0x80] sm:$0xff]
    %v156 = vld [vmem:[#allocation7 + $0x88] sm:$0xff]
    %v157 = vld [vmem:[#allocation7 + $0x90] sm:$0xff]
    %v158 = vld [vmem:[#allocation7 + $0x98] sm:$0xff]
    %v159 = vld [vmem:[#allocation7 + $0xa0] sm:$0xff]
    %v160 = vld [vmem:[#allocation7 + $0xa8] sm:$0xff]
    %v161 = vld [vmem:[#allocation7 + $0xb0] sm:$0xff]
    %v162 = vld [vmem:[#allocation7 + $0xb8] sm:$0xff]
    %v163 = vld [vmem:[#allocation7 + $0xc0] sm:$0xff]
    %v164 = vld [vmem:[#allocation7 + $0xc8] sm:$0xff]
    %v165 = vld [vmem:[#allocation7 + $0xd0] sm:$0xff]
    %v166 = vld [vmem:[#allocation7 + $0xd8] sm:$0xff]
    %v167 = vld [vmem:[#allocation7 + $0xe0] sm:$0xff]
    %v168 = vld [vmem:[#allocation7 + $0xe8] sm:$0xff]
    %v169 = vld [vmem:[#allocation7 + $0xf0] sm:$0xff]
    %v170 = vld [vmem:[#allocation7 + $0xf8] sm:$0xff]
    %v171 = vld [vmem:[#allocation7 + $0x100] sm:$0xff]
    %v172 = vld [vmem:[#allocation7 + $0x108] sm:$0xff]
    %v173 = vld [vmem:[#allocation7 + $0x110] sm:$0xff]
    %v174 = vld [vmem:[#allocation7 + $0x118] sm:$0xff]
    %v175 = vld [vmem:[#allocation7 + $0x120] sm:$0xff]
    %v176 = vld [vmem:[#allocation7 + $0x128] sm:$0xff]
    %v177 = vld [vmem:[#allocation7 + $0x130] sm:$0xff]
    %v178 = vld [vmem:[#allocation7 + $0x138] sm:$0xff]
    %v179 = vld [vmem:[#allocation7 + $0x140] sm:$0xff]
    %v180 = vld [vmem:[#allocation7 + $0x148] sm:$0xff]
    %v181 = vld [vmem:[#allocation7 + $0x150] sm:$0xff]
    %v182 = vld [vmem:[#allocation7 + $0x158] sm:$0xff]
    %v183 = vld [vmem:[#allocation7 + $0x160] sm:$0xff]
    %v184 = vld [vmem:[#allocation7 + $0x168] sm:$0xff]
    %v185 = vld [vmem:[#allocation7 + $0x170] sm:$0xff]
    %v186 = vld [vmem:[#allocation7 + $0x178] sm:$0xff]
    %v187 = vld [vmem:[#allocation7 + $0x180] sm:$0xff]
    %v188 = vld [vmem:[#allocation7 + $0x188] sm:$0xff]
    %v189 = vld [vmem:[#allocation7 + $0x190] sm:$0xff]
    %v190 = vld [vmem:[#allocation7 + $0x198] sm:$0xff]
    %v191 = vld [vmem:[#allocation7 + $0x1a0] sm:$0xff]
    %v192 = vld [vmem:[#allocation7 + $0x1a8] sm:$0xff]
    %v193 = vld [vmem:[#allocation7 + $0x1b0] sm:$0xff]
    %v194 = vld [vmem:[#allocation7 + $0x1b8] sm:$0xff]
    %v195 = vld [vmem:[#allocation7 + $0x1c0] sm:$0xff]
    %v196 = vld [vmem:[#allocation7 + $0x1c8] sm:$0xff]
    %v197 = vld [vmem:[#allocation7 + $0x1d0] sm:$0xff]
    %v198 = vld [vmem:[#allocation7 + $0x1d8] sm:$0xff]
    %v199 = vld [vmem:[#allocation7 + $0x1e0] sm:$0xff]
    %v200 = vld [vmem:[#allocation7 + $0x1e8] sm:$0xff]
    %v201 = vld [vmem:[#allocation7 + $0x1f0] sm:$0xff]
    %v202 = vld [vmem:[#allocation7 + $0x1f8] sm:$0xff]
    %v203 = vpack.c.bf16 %v141, %v139
    %v204 = vpack.c.bf16 %v142, %v140
    %v205 = vpack.c.bf16 %v145, %v143
    %v206 = vpack.c.bf16 %v146, %v144
    %v207 = vpack.c.bf16 %v149, %v147
    %v208 = vpack.c.bf16 %v150, %v148
    %v209 = vpack.c.bf16 %v153, %v151
    %v210 = vpack.c.bf16 %v154, %v152
    %v211 = vpack.c.bf16 %v157, %v155
    %v212 = vpack.c.bf16 %v158, %v156
    %v213 = vpack.c.bf16 %v161, %v159
    %v214 = vpack.c.bf16 %v162, %v160
    %v215 = vpack.c.bf16 %v165, %v163
    %v216 = vpack.c.bf16 %v166, %v164
    %v217 = vpack.c.bf16 %v169, %v167
    %v218 = vpack.c.bf16 %v170, %v168
    %v219 = vpack.c.bf16 %v173, %v171
    %v220 = vpack.c.bf16 %v174, %v172
    %v221 = vpack.c.bf16 %v177, %v175
    %v222 = vpack.c.bf16 %v178, %v176
    %v223 = vpack.c.bf16 %v181, %v179
    %v224 = vpack.c.bf16 %v182, %v180
    %v225 = vpack.c.bf16 %v185, %v183
    %v226 = vpack.c.bf16 %v186, %v184
    %v227 = vpack.c.bf16 %v189, %v187
    %v228 = vpack.c.bf16 %v190, %v188
    %v229 = vpack.c.bf16 %v193, %v191
    %v230 = vpack.c.bf16 %v194, %v192
    %v231 = vpack.c.bf16 %v197, %v195
    %v232 = vpack.c.bf16 %v198, %v196
    %v233 = vpack.c.bf16 %v201, %v199
    %v234 = vpack.c.bf16 %v202, %v200
    %v235 = vld [vmem:[%s4] sm:$0x3]
    %v237 = vlaneseq
    %v238 = vshrl.u32 %v237, 7
    %v239 = vsub.s32 0, %v238
    %v240 = vrot.slane %v235, %v239
    %v241 = vlaneseq
    %v242 = vshrl.u32 %v241, 7
    %v243 = vsub.s32 1, %v242
    %v244 = vrot.slane %v235, %v243
    %247 = vmatprep.subr.bf16.mxu0 %v204
    %248 = vmatpush1.bf16.msra.mxu0 %v203
    %249 = vmatprep.subr.bf16.mxu0 %v206
    %250 = vmatpush1.bf16.msra.mxu0 %v205
    %251 = vmatprep.subr.bf16.mxu0 %v208
    %252 = vmatpush1.bf16.msra.mxu0 %v207
    %253 = vmatprep.subr.bf16.mxu0 %v210
    %254 = vmatpush1.bf16.msra.mxu0 %v209
    %255 = vmatprep.subr.bf16.mxu0 %v212
    %256 = vmatpush1.bf16.msra.mxu0 %v211
    %257 = vmatprep.subr.bf16.mxu0 %v214
    %258 = vmatpush1.bf16.msra.mxu0 %v213
    %259 = vmatprep.subr.bf16.mxu0 %v216
    %260 = vmatpush1.bf16.msra.mxu0 %v215
    %261 = vmatprep.subr.bf16.mxu0 %v218
    %262 = vmatpush1.bf16.msra.mxu0 %v217
    %263 = vmatprep.subr.bf16.mxu0 %v220
    %264 = vmatpush1.bf16.msra.mxu0 %v219
    %265 = vmatprep.subr.bf16.mxu0 %v222
    %266 = vmatpush1.bf16.msra.mxu0 %v221
    %267 = vmatprep.subr.bf16.mxu0 %v224
    %268 = vmatpush1.bf16.msra.mxu0 %v223
    %269 = vmatprep.subr.bf16.mxu0 %v226
    %270 = vmatpush1.bf16.msra.mxu0 %v225
    %271 = vmatprep.subr.bf16.mxu0 %v228
    %272 = vmatpush1.bf16.msra.mxu0 %v227
    %273 = vmatprep.subr.bf16.mxu0 %v230
    %274 = vmatpush1.bf16.msra.mxu0 %v229
    %275 = vmatprep.subr.bf16.mxu0 %v232
    %276 = vmatpush1.bf16.msra.mxu0 %v231
    %277 = vmatprep.subr.bf16.mxu0 %v234
    %278 = vmatpush1.bf16.msra.mxu0 %v233
    %279 = vmatprep.mubr.bf16.mxu0 %v138
    %280 = vmatmul.mubr.bf16.gmra.mrb[0].mxu0 %v137
    %v281 = vpop.f32.mrb[0].mxu0
    %v282 = vadd.f32 %v240, %v281
    %v283 = vpop.f32.mrb[0].mxu0
    %v284 = vadd.f32 %v244, %v283
    %v285 = vpop.f32.mrb[0].mxu0
    %v286 = vpop.f32.mrb[0].mxu0
    %287 = vdwg.mxu0
    %v288 = vmax.f32 %v282, 0.0
    %v289 = vmax.f32 %v284, 0.0
    %v290 = vld [vmem:[%s5] sm:$0x3]
    %v292 = vlaneseq
    %v293 = vshrl.u32 %v292, 7
    %v294 = vsub.s32 0, %v293
    %v295 = vrot.slane %v290, %v294
    %v296 = vlaneseq
    %v297 = vshrl.u32 %v296, 7
    %v298 = vsub.s32 1, %v297
    %v299 = vrot.slane %v290, %v298
    %v302 = vmul.f32 %v288, %v295
    %v303 = vmul.f32 %v289, %v299
    %v304 = vadd.f32 %v302, %v303
    %305 = vadd.xlane.f32.xlu0 %v304
    %v306 = vpop.xlane.xlu0 %305
    %s307 = sld [smem:[#allocation2]]
    %v308 = vstv %s307
    %v309 = vadd.f32 %v306, %v308
    %vm310 = vcmask 7168
    %311 = vst.msk [vmem:[%s7] sm:$0xff] %vm310, %v309
    // Predicated region
    $region42: #{critic_forward.1} parent=1 // pred_check
      _
    $region43: #{critic_forward.1} parent=1 // pred_check_branch
      %313 = sbr.rel (0) target = $region45
    $region44: #{critic_forward.1} parent=1 // pred_region
      _
    $region45: #{critic_forward.1} parent=1 // pred_fallthru
      _
    // Predicated region
    $region46: #{critic_forward.1} parent=1 // pred_check
      _
    $region47: #{critic_forward.1} parent=1 // pred_check_branch
      %315 = sbr.rel (0) target = $region49
    $region48: #{critic_forward.1} parent=1 // pred_region
      _
    $region49: #{critic_forward.1} parent=1 // pred_fallthru
      _
    %316 = vsyncpa [#allocation4], 1
    %317 = vsyncpa [#allocation6], 1

</llo_original>
